<compile_context>
chip_gen: v5e
topology: v5e:2x2
jax: 0.10.0
libtpu: 0.0.40
codegen_flags: <defaults>
</compile_context>

<pallas_src>
import functools

import numpy as np

import jax
import jax.numpy as jnp
from jax import lax
from jax.experimental import pallas as pl
from jax.experimental.pallas import tpu as pltpu

_LANE = 128
_MIB = 1024 * 1024


def _round_up(v, m):
    return ((v + m - 1) // m) * m


def _vmem_capacity_bytes():
    """Physical VMEM per TensorCore; conservative fallback if the query fails."""
    try:
        info = pltpu.get_tpu_info()
        for name in ("vmem_capacity_bytes", "vmem_size_bytes", "vmem_bytes"):
            v = getattr(info, name, None)
            if v:
                return int(v)
    except Exception:  # sizing heuristic only -- never fatal
        pass
    return 64 * _MIB   # v7x per-core physical VMEM (smallest of v5e/v6e/v7x)


# ---------------------------------------------------------------------------
# Kernels
# ---------------------------------------------------------------------------

def _se3_gn_fused_kernel(x_ref, sqm_ref, d1_ref, w_ref, b_ref, o_ref, *, eps):
    """Single-visit path: whole (C, S) slab resident in VMEM -> 1R + 1W."""
    xf = x_ref[...].astype(jnp.float32)                          # (C, S)
    s1 = jnp.sum(xf, axis=-1, keepdims=True)                     # (C, 1)
    s2 = jnp.sum(xf * xf, axis=-1, keepdims=True)                # (C, 1)
    # Per-channel -> per-group stats with one tiny one-hot matmul (1/(m*S)
    # denominators folded into sqm); the mean column is only kept for d==1
    # fields via the d1 indicator.
    stats = jnp.dot(sqm_ref[...], jnp.concatenate([s1, s2], axis=1),
                    preferred_element_type=jnp.float32)          # (C, 2)
    mean = stats[:, 0:1] * d1_ref[...]
    # TODO(synk): E[x^2] - mean^2 can lose precision when |mean| >> std; use a
    # mean-subtracted second reduction here if that regime matters.
    inv = lax.rsqrt(stats[:, 1:2] - mean * mean + eps)           # EUP rsqrt
    scale = inv * w_ref[...]
    off = b_ref[...] - mean * scale
    o_ref[...] = (xf * scale + off).astype(o_ref.dtype)


def _se3_gn_tiled_kernel(x_ref, sqm_ref, d1_ref, w_ref, b_ref, o_ref,
                         sum_acc, sq_acc, scale_ref, off_ref,
                         *, n_s, last_valid, eps):
    """Two-pass S-tiled path, grid = (B, 2*n_s), t = program_id(1).

      t <  n_s : stats pass  -- accumulate per-channel sum / sum-of-squares.
      t == n_s : combine     -- per-group stats (one-hot MXU matmul), rsqrt
                                (EUP), fold affine -> per-channel scale/offset.
      t >= n_s : apply pass  -- single fused lane-dense store o = x*scale+off.
    """
    t = pl.program_id(1)

    @pl.when(t == 0)
    def _init():
        sum_acc[...] = jnp.zeros_like(sum_acc)
        sq_acc[...] = jnp.zeros_like(sq_acc)

    x = x_ref[...]                                               # (C, TS)

    def _accum(xf):
        # Per-tile reduction: the TS/128 per-column adds are VPU work; the one
        # trailing cross-lane reduce per tile is XLU but amortizes to <5% of
        # pass-1 work at multi-MiB tiles, and keeps the accumulators out of
        # the store path (a per-lane (C,128) ref accumulator would add a VMEM
        # load+store per chunk instead).
        sum_acc[...] += jnp.sum(xf, axis=-1, keepdims=True)
        sq_acc[...] += jnp.sum(xf * xf, axis=-1, keepdims=True)

    if last_valid is None:
        # S is a multiple of TS: every stats tile is full -> unmasked path.
        @pl.when(t < n_s)
        def _stats():
            _accum(x.astype(jnp.float32))
    else:
        # Ragged final tile: its out-of-range lanes hold undefined data (the
        # input is NOT padded in HBM), so mask just that one tile and keep all
        # full tiles on the unmasked vld/vadd path.
        @pl.when(t < n_s - 1)
        def _stats_full():
            _accum(x.astype(jnp.float32))

        @pl.when(t == n_s - 1)
        def _stats_last():
            xf = x.astype(jnp.float32)
            lane = lax.broadcasted_iota(jnp.int32, xf.shape, 1)
            _accum(jnp.where(lane < last_valid, xf, 0.0))

    @pl.when(t == n_s)
    def _combine():
        stats = jnp.dot(sqm_ref[...],
                        jnp.concatenate([sum_acc[...], sq_acc[...]], axis=1),
                        preferred_element_type=jnp.float32)      # (C, 2)
        mean = stats[:, 0:1] * d1_ref[...]
        # TODO(synk): E[x^2] - mean^2 loses precision when |mean| >> std.
        inv = lax.rsqrt(stats[:, 1:2] - mean * mean + eps)
        scale = inv * w_ref[...]
        scale_ref[...] = scale
        off_ref[...] = b_ref[...] - mean * scale

    @pl.when(t >= n_s)
    def _apply():
        # Fused full-tile store; the ragged last output block's out-of-range
        # lanes are dropped by Pallas' masked writeback of partial blocks.
        o_ref[...] = (x.astype(jnp.float32) * scale_ref[...]
                      + off_ref[...]).astype(o_ref.dtype)


# ---------------------------------------------------------------------------
# Wrapper
# ---------------------------------------------------------------------------

def _build_constants(Rs, C, S, weight, bias, affine):
    """Per-channel affine params, d==1 indicator and the one-hot combine
    matrix with the 1/(m*S) denominators folded in."""
    # TODO(synk): sq_mat is O(C^2); switch to a (G,C) reduce + (C,G) expand
    # pair if C ever grows into the thousands.
    w_chan = np.zeros((C, 1), np.float32)
    b_chan = np.zeros((C, 1), np.float32)
    d1_ind = np.zeros((C, 1), np.float32)
    sq_mat = np.zeros((C, C), np.float32)
    weight_np = None if weight is None else np.asarray(weight, np.float32).reshape(-1)
    bias_np = None if bias is None else np.asarray(bias, np.float32).reshape(-1)
    ix = iw = ib = 0
    for m, d in Rs:
        md = m * d
        sq_mat[ix:ix + md, ix:ix + md] = 1.0 / float(m * S)
        if d == 1:
            d1_ind[ix:ix + md, 0] = 1.0
        if affine:
            w_chan[ix:ix + md, 0] = np.repeat(weight_np[iw:iw + m], d)
            iw += m
            if d == 1:
                b_chan[ix:ix + md, 0] = bias_np[ib:ib + m]
                ib += m
        else:
            w_chan[ix:ix + md, 0] = 1.0
        ix += md
    return (jnp.asarray(sq_mat), jnp.asarray(d1_ind),
            jnp.asarray(w_chan), jnp.asarray(b_chan))


def se3_group_norm(x, Rs, weight=None, bias=None, eps=1e-5, affine=True,
                   tile_s=None):
    """SE3GroupNorm forward.  x: [B, C, X, Y, Z], C == sum(m*d for (m,d) in Rs).

    tile_s: optional lane-tile override (multiple of 128); also forces the
    tiled two-pass path (useful for testing).
    """
    Rs = [(int(m), int(d)) for (m, d) in Rs if m * d > 0]
    B, C = int(x.shape[0]), int(x.shape[1])
    S = 1
    for s in x.shape[2:]:
        S *= int(s)
    assert C == sum(m * d for m, d in Rs)

    sq_mat, d1_ind, w_chan, b_chan = _build_constants(Rs, C, S, weight, bias,
                                                      affine)
    x3 = x.reshape(B, C, S)                       # contiguous -> free reshape

    in_b = int(np.dtype(x.dtype).itemsize)
    out_b = in_b
    vmem_cap = _vmem_capacity_bytes()
    eps = float(eps)

    # ---- Fast path: whole per-batch slab resident in VMEM (1 read + 1 write).
    sp = _round_up(S, _LANE)
    cp = _round_up(C, 8)
    slab_cost = cp * sp * (2 * in_b + 2 * out_b + 3 * 4)   # 2-buf in/out + f32 temps
    if tile_s is None and slab_cost <= int(vmem_cap * 0.7):
        vmem_limit = min(int(vmem_cap * 0.9),
                         max(32 * _MIB, slab_cost + 8 * _MIB))
        out3 = pl.pallas_call(
            functools.partial(_se3_gn_fused_kernel, eps=eps),
            out_shape=jax.ShapeDtypeStruct((B, C, S), x.dtype),
            grid_spec=pltpu.PrefetchScalarGridSpec(
                num_scalar_prefetch=0,
                grid=(B,),
                in_specs=[
                    pl.BlockSpec((None, C, S), lambda b: (b, 0, 0)),
                    pl.BlockSpec((C, C), lambda b: (0, 0)),   # group combine
                    pl.BlockSpec((C, 1), lambda b: (0, 0)),   # d==1 indicator
                    pl.BlockSpec((C, 1), lambda b: (0, 0)),   # weight / channel
                    pl.BlockSpec((C, 1), lambda b: (0, 0)),   # bias / channel
                ],
                out_specs=pl.BlockSpec((None, C, S), lambda b: (b, 0, 0)),
            ),
            compiler_params=pltpu.CompilerParams(
                dimension_semantics=("parallel",),
                vmem_limit_bytes=vmem_limit,
            ),
        )(x3, sq_mat, d1_ind, w_chan, b_chan)
        return out3.reshape(x.shape)

    # ---- Tiled two-pass path (2 reads + 1 write).
    if tile_s is None:
        # Multi-MiB lane tiles sized from physical VMEM: Buffered(3) input +
        # double-buffered output + ~2 f32 temporaries per element.
        tile_budget = int(vmem_cap * 0.55)
        per_lane = C * (3 * in_b + 2 * out_b + 2 * 4)
        TS = max(_LANE, ((tile_budget // per_lane) // _LANE) * _LANE)
        TS = min(TS, _round_up(S, _LANE))
    else:
        assert tile_s % _LANE == 0
        TS = min(int(tile_s), _round_up(S, _LANE))
    n_s = -(-S // TS)
    rem = S - (n_s - 1) * TS
    last_valid = None if rem == TS else rem       # tile-local valid lane count

    tile_bytes = C * TS * (3 * in_b + 2 * out_b)
    vmem_limit = min(int(vmem_cap * 0.9),
                     max(32 * _MIB, tile_bytes + 16 * _MIB))

    kernel = functools.partial(_se3_gn_tiled_kernel, n_s=n_s,
                               last_valid=last_valid, eps=eps)

    out3 = pl.pallas_call(
        kernel,
        out_shape=jax.ShapeDtypeStruct((B, C, S), x.dtype),
        grid_spec=pltpu.PrefetchScalarGridSpec(
            num_scalar_prefetch=0,
            grid=(B, 2 * n_s),
            in_specs=[
                # x tiles: pass 1 and pass 2 stream the same lane-dense tiles.
                # Buffered(3) covers the combine-step bubble and the
                # pass-1 -> pass-2 block-index jump (n_s-1 -> 0).
                pl.BlockSpec((None, C, TS), lambda b, t: (b, 0, t % n_s),
                             pipeline_mode=pl.Buffered(3)),
                pl.BlockSpec((C, C), lambda b, t: (0, 0)),   # group combine
                pl.BlockSpec((C, 1), lambda b, t: (0, 0)),   # d==1 indicator
                pl.BlockSpec((C, 1), lambda b, t: (0, 0)),   # weight / channel
                pl.BlockSpec((C, 1), lambda b, t: (0, 0)),   # bias / channel
            ],
            # Output only advances during pass 2; during pass 1 it parks on
            # block 0 and is never written there.  Writeback happens on
            # block-index change, and block 0 is fully written at t == n_s
            # before its index advances, so nothing stale reaches HBM.
            out_specs=pl.BlockSpec(
                (None, C, TS), lambda b, t: (b, 0, jnp.maximum(t - n_s, 0))),
            scratch_shapes=[
                pltpu.VMEM((C, 1), jnp.float32),   # per-channel sum
                pltpu.VMEM((C, 1), jnp.float32),   # per-channel sum of squares
                pltpu.VMEM((C, 1), jnp.float32),   # per-channel scale
                pltpu.VMEM((C, 1), jnp.float32),   # per-channel offset
            ],
        ),
        compiler_params=pltpu.CompilerParams(
            # TODO(synk): for B == 1 on v7x (2 TCs) also shard the S tiles
            # across cores with a shared-memory partial-stat exchange.
            dimension_semantics=("parallel", "arbitrary"),
            vmem_limit_bytes=vmem_limit,
        ),
    )(x3, sq_mat, d1_ind, w_chan, b_chan)

    return out3.reshape(x.shape)


# ---------------------------------------------------------------------------
# Pure-JAX reference (transcription of the PyTorch forward) + tests
# ---------------------------------------------------------------------------

def se3_group_norm_ref(x, Rs, weight, bias, eps=1e-5, affine=True):
    Rs = [(m, d) for (m, d) in Rs if m * d > 0]
    B = x.shape[0]
    fields = []
    ix = iw = ib = 0
    for m, d in Rs:
        field = x[:, ix:ix + m * d]
        ix += m * d
        field = field.reshape(B, m, d, -1)
        if d == 1:
            fm = field.reshape(B, -1).mean(-1)
            field = field - fm.reshape(-1, 1, 1, 1)
        fn = jnp.sum(field ** 2, axis=2)
        fn = fn.reshape(B, -1).mean(-1)
        fn = (fn + eps) ** -0.5
        fn = fn.reshape(-1, 1, 1, 1)
        if affine:
            w = weight[iw:iw + m]
            iw += m
            fn = fn * w.reshape(1, -1, 1, 1)
        field = field * fn
        if affine and d == 1:
            bb = bias[ib:ib + m]
            ib += m
            field = field + bb.reshape(1, -1, 1, 1)
        fields.append(field.reshape(B, m * d, *x.shape[2:]))
    return jnp.concatenate(fields, axis=1)


if __name__ == "__main__":
    keys = jax.random.split(jax.random.PRNGKey(0), 3)
    # Rs = [(multiplicity, dimension), ...]: 2 scalar, 2 l=1, 1 l=2 fields
    # -> stacked channels = 2*1 + 2*3 + 1*5 = 13.
    Rs = [(2, 1), (2, 3), (1, 5)]
    n_w = sum(m for m, d in Rs)              # weight: sum(m) = 5
    n_b = sum(m for m, d in Rs if d == 1)    # bias:   sum(m for d==1) = 2
    weight = 1.0 + 0.1 * jnp.arange(n_w, dtype=jnp.float32)
    bias = 0.01 * jnp.arange(n_b, dtype=jnp.float32)

    # Case 1: default dispatch -> single-pass VMEM-resident fast path.
    x1 = jax.random.normal(keys[0], (2, 13, 4, 4, 4), dtype=jnp.float32)
    out1 = jax.block_until_ready(se3_group_norm(x1, Rs, weight, bias, eps=1e-5))
    ref1 = se3_group_norm_ref(x1, Rs, weight, bias, eps=1e-5)
    assert jnp.allclose(out1, ref1, atol=1e-4, rtol=1e-4), float(
        jnp.max(jnp.abs(out1 - ref1)))

    # Case 2: forced 128-lane tile -> tiled two-pass path, S divisible by TS
    # (n_s = 2, cross-tile accumulation, unmasked stats).
    x2 = jax.random.normal(keys[1], (2, 13, 4, 8, 8), dtype=jnp.float32)
    out2 = jax.block_until_ready(
        se3_group_norm(x2, Rs, weight, bias, eps=1e-5, tile_s=128))
    ref2 = se3_group_norm_ref(x2, Rs, weight, bias, eps=1e-5)
    assert jnp.allclose(out2, ref2, atol=1e-4, rtol=1e-4), float(
        jnp.max(jnp.abs(out2 - ref2)))

    # Case 3: S = 4*6*6 = 144 with a 128-lane tile -> ragged final tile
    # (masked stats, partial output block) on the tiled path.
    x3 = jax.random.normal(keys[2], (2, 13, 4, 6, 6), dtype=jnp.float32)
    out3 = jax.block_until_ready(
        se3_group_norm(x3, Rs, weight, bias, eps=1e-5, tile_s=128))
    ref3 = se3_group_norm_ref(x3, Rs, weight, bias, eps=1e-5)
    assert jnp.allclose(out3, ref3, atol=1e-4, rtol=1e-4), float(
        jnp.max(jnp.abs(out3 - ref3)))

    print("KERNEL_OK")
</pallas_src>

<mosaic_0001>
module attributes {stable_mosaic.version = 11 : i64} {
  func.func @_se3_gn_fused_kernel(%arg0: i32, %arg1: memref<1x13x64xf32, #tpu.memory_space<vmem>>, %arg2: memref<13x13xf32, #tpu.memory_space<vmem>>, %arg3: memref<13x1xf32, #tpu.memory_space<vmem>>, %arg4: memref<13x1xf32, #tpu.memory_space<vmem>>, %arg5: memref<13x1xf32, #tpu.memory_space<vmem>>, %arg6: memref<1x13x64xf32, #tpu.memory_space<vmem>>) attributes {dimension_semantics = [#tpu.dimension_semantics<parallel>], iteration_bounds = array<i64: 2>, scalar_prefetch = 0 : i64, scratch_operands = 0 : i64, tpu.core_type = #tpu.core_type<tc>, window_params = [{transform_indices = @transform_0, window_bounds = array<i64: 1, 13, 64>}, {pipeline_mode = #tpu.pipeline_mode<synchronous>, transform_indices = @transform_1, window_bounds = array<i64: 13, 13>}, {pipeline_mode = #tpu.pipeline_mode<synchronous>, transform_indices = @transform_2, window_bounds = array<i64: 13, 1>}, {pipeline_mode = #tpu.pipeline_mode<synchronous>, transform_indices = @transform_3, window_bounds = array<i64: 13, 1>}, {pipeline_mode = #tpu.pipeline_mode<synchronous>, transform_indices = @transform_4, window_bounds = array<i64: 13, 1>}, {transform_indices = @transform_5, window_bounds = array<i64: 1, 13, 64>}]} {
    %c0 = arith.constant 0 : index
    %c0_0 = arith.constant 0 : index
    %c0_1 = arith.constant 0 : index
    %0 = vector.load %arg1[%c0, %c0_0, %c0_1] : memref<1x13x64xf32, #tpu.memory_space<vmem>>, vector<1x13x64xf32>
    %1 = vector.shape_cast %0 : vector<1x13x64xf32> to vector<13x64xf32>
    %cst = arith.constant dense<0.000000e+00> : vector<13xf32>
    %2 = vector.multi_reduction <add>, %1, %cst [1] : vector<13x64xf32> to vector<13xf32>
    %3 = vector.shape_cast %2 : vector<13xf32> to vector<13x1xf32>
    %4 = arith.mulf %1, %1 : vector<13x64xf32>
    %cst_2 = arith.constant dense<0.000000e+00> : vector<13xf32>
    %5 = vector.multi_reduction <add>, %4, %cst_2 [1] : vector<13x64xf32> to vector<13xf32>
    %6 = vector.shape_cast %5 : vector<13xf32> to vector<13x1xf32>
    %c0_3 = arith.constant 0 : index
    %c0_4 = arith.constant 0 : index
    %7 = vector.load %arg2[%c0_3, %c0_4] : memref<13x13xf32, #tpu.memory_space<vmem>>, vector<13x13xf32>
    %8 = tpu.concatenate %3, %6 in 1 : vector<13x1xf32>, vector<13x1xf32> -> vector<13x2xf32>
    %cst_5 = arith.constant dense<0.000000e+00> : vector<13x2xf32>
    %9 = tpu.matmul %7, %8, %cst_5 {dimension_numbers = #tpu.dot_dimension_numbers<[1], [0], [0], [1], [0, 0, 1, 1], [], []>} : vector<13x13xf32>, vector<13x2xf32>, vector<13x2xf32> -> vector<13x2xf32>
    %10 = vector.extract_strided_slice %9 {offsets = [0, 0], sizes = [13, 1], strides = [1, 1]} : vector<13x2xf32> to vector<13x1xf32>
    %c0_6 = arith.constant 0 : index
    %c0_7 = arith.constant 0 : index
    %11 = vector.load %arg3[%c0_6, %c0_7] : memref<13x1xf32, #tpu.memory_space<vmem>>, vector<13x1xf32>
    %12 = arith.mulf %10, %11 : vector<13x1xf32>
    %13 = vector.extract_strided_slice %9 {offsets = [0, 1], sizes = [13, 1], strides = [1, 1]} : vector<13x2xf32> to vector<13x1xf32>
    %14 = arith.mulf %12, %12 : vector<13x1xf32>
    %15 = arith.subf %13, %14 : vector<13x1xf32>
    %cst_8 = arith.constant 9.99999974E-6 : f32
    %16 = vector.broadcast %cst_8 : f32 to vector<13x1xf32>
    %17 = arith.addf %15, %16 : vector<13x1xf32>
    %18 = math.rsqrt %17 : vector<13x1xf32>
    %c0_9 = arith.constant 0 : index
    %c0_10 = arith.constant 0 : index
    %19 = vector.load %arg4[%c0_9, %c0_10] : memref<13x1xf32, #tpu.memory_space<vmem>>, vector<13x1xf32>
    %20 = arith.mulf %18, %19 : vector<13x1xf32>
    %c0_11 = arith.constant 0 : index
    %c0_12 = arith.constant 0 : index
    %21 = vector.load %arg5[%c0_11, %c0_12] : memref<13x1xf32, #tpu.memory_space<vmem>>, vector<13x1xf32>
    %22 = arith.mulf %12, %20 : vector<13x1xf32>
    %23 = arith.subf %21, %22 : vector<13x1xf32>
    %24 = vector.broadcast %20 : vector<13x1xf32> to vector<13x64xf32>
    %25 = arith.mulf %1, %24 : vector<13x64xf32>
    %26 = vector.broadcast %23 : vector<13x1xf32> to vector<13x64xf32>
    %27 = arith.addf %25, %26 : vector<13x64xf32>
    %c0_13 = arith.constant 0 : index
    %c0_14 = arith.constant 0 : index
    %c0_15 = arith.constant 0 : index
    %28 = vector.load %arg6[%c0_13, %c0_14, %c0_15] : memref<1x13x64xf32, #tpu.memory_space<vmem>>, vector<1x13x64xf32>
    %29 = vector.shape_cast %28 : vector<1x13x64xf32> to vector<13x64xf32>
    %30 = vector.shape_cast %27 : vector<13x64xf32> to vector<1x13x64xf32>
    tpu.vector_store %arg6[%c0_13, %c0_14, %c0_15], %30 {strides = array<i32>} : memref<1x13x64xf32, #tpu.memory_space<vmem>>, vector<1x13x64xf32>,
    return
  }
  func.func @transform_0(%arg0: i32) -> (i32, i32, i32) {
    %c0_i32 = arith.constant 0 : i32
    %c0_i32_0 = arith.constant 0 : i32
    %c0_i32_1 = arith.constant 0 : i32
    return %arg0, %c0_i32, %c0_i32_0 : i32, i32, i32
  }
  func.func @transform_1(%arg0: i32) -> (i32, i32) {
    %c0_i32 = arith.constant 0 : i32
    %c0_i32_0 = arith.constant 0 : i32
    %c0_i32_1 = arith.constant 0 : i32
    return %c0_i32, %c0_i32_0 : i32, i32
  }
  func.func @transform_2(%arg0: i32) -> (i32, i32) {
    %c0_i32 = arith.constant 0 : i32
    %c0_i32_0 = arith.constant 0 : i32
    %c0_i32_1 = arith.constant 0 : i32
    return %c0_i32, %c0_i32_0 : i32, i32
  }
  func.func @transform_3(%arg0: i32) -> (i32, i32) {
    %c0_i32 = arith.constant 0 : i32
    %c0_i32_0 = arith.constant 0 : i32
    %c0_i32_1 = arith.constant 0 : i32
    return %c0_i32, %c0_i32_0 : i32, i32
  }
  func.func @transform_4(%arg0: i32) -> (i32, i32) {
    %c0_i32 = arith.constant 0 : i32
    %c0_i32_0 = arith.constant 0 : i32
    %c0_i32_1 = arith.constant 0 : i32
    return %c0_i32, %c0_i32_0 : i32, i32
  }
  func.func @transform_5(%arg0: i32) -> (i32, i32, i32) {
    %c0_i32 = arith.constant 0 : i32
    %c0_i32_0 = arith.constant 0 : i32
    %c0_i32_1 = arith.constant 0 : i32
    return %arg0, %c0_i32, %c0_i32_0 : i32, i32, i32
  }
}

</mosaic_0001>

<llo_original>
// kernel: tpu_custom_call.1
$region0: #{tpu_custom_call.1}
  #allocation0 [shape = 'u32[]', space=smem, size = 0x4, offset = 0x4, fixed_abs, tag = 'smem constant byte address 0x4 - core index']
  #allocation1 [shape = 'u32[72,128]{1,0:T(1,128)}', space=vmem, size = 0x9000, scoped, tag = 'internal scratch']
  %s0 = inlined_call_operand.vmem [shape: f32[2,13,64], index: 0, kind: input, shape index: {}]
  %s1 = inlined_call_operand.vmem [shape: f32[13,13], index: 1, kind: input, shape index: {}]
  %s2 = inlined_call_operand.vmem [shape: f32[13,1], index: 2, kind: input, shape index: {}]
  %s3 = inlined_call_operand.vmem [shape: f32[13,1], index: 3, kind: input, shape index: {}]
  %s4 = inlined_call_operand.vmem [shape: f32[13,1], index: 4, kind: input, shape index: {}]
  %s5 = inlined_call_operand.vmem [shape: f32[2,13,64], index: 5, kind: output, shape index: {}]
  %s6 = sld [smem:[#allocation0]]
  $region53: #{tpu_custom_call.1} parent=0
    _
  %s8 = ssub.s32 1, %s6
  %s9 = scalar_select 0, %s8, %s6
  loop: start=0, step=1, limit=4
  $region2: #{tpu_custom_call.1} parent=0 // loop_pre_header
    _
  $region3: #{tpu_custom_call.1} parent=0 // loop_header
    %s11 = sphi 0, %s15
    %p12 = scmp.ge.s32.totalorder %s11, 4
    %s21 = sphi 0, %s23
    %s24 = sphi 0, %s21
    %s25 = sphi 0, %s24
    %s41 = sphi 0, %s25
    %s45 = sphi 0, %s45
    %s47 = sphi 0, %s45
    %s48 = sphi 0, %s47
    %s62 = sphi 0, %s48
    %s66 = sphi 0, %s66
    %s68 = sphi 0, %s66
    %s69 = sphi 0, %s68
    %s83 = sphi 0, %s69
    %s87 = sphi 0, %s87
    %s89 = sphi 0, %s87
    %s90 = sphi 0, %s89
    %s104 = sphi 0, %s90
    %s108 = sphi 0, %s108
    %s110 = sphi 0, %s108
    %s111 = sphi 0, %s110
    %s125 = sphi 0, %s111
    %s131 = sphi 0, %s133
    %s134 = sphi 0, %s131
    %s135 = sphi 0, %s134
    %s151 = sphi 0, %s135
  $region4: #{tpu_custom_call.1} parent=0 // loop_header_branch
    %14 = sbr.rel (%p12) target = $region8
  $region5: #{tpu_custom_call.1} parent=0 // loop_body
    %s16 = ssub.s32 %s11, 1
    %s17 = ssub.s32 %s11, 2
    %s18 = sadd.s32 %s11, 1
    %s19 = ssub.s32 %s11, %s18
    %p20 = scmp.eq.s32.totalorder %s19, 0
    %s22 = sadd.s32 %s21, 1
    %s23 = scalar_select %p20, %s21, %s22
    %p26 = pneg %p20
    %p27 = scmp.eq.s32.totalorder %s11, 1
    %p28 = por %p26, %p27
    %p29 = scmp.ne.s32.totalorder %s21, %s24
    %p30 = scmp.eq.s32.totalorder %s11, 0
    %p31 = por %p29, %p30
    %p32 = scmp.ne.s32.totalorder %s21, %s24
    %p33 = scmp.eq.s32.totalorder %s16, 1
    %p34 = por %p32, %p33
    %p35 = scmp.ne.s32.totalorder %s24, %s25
    %p36 = scmp.eq.s32.totalorder %s16, 0
    %p37 = por %p35, %p36
    %p38 = scmp.ne.s32.totalorder %s24, %s25
    %p39 = scmp.eq.s32.totalorder %s17, 1
    %p40 = por %p38, %p39
    %p42 = scmp.ne.s32.totalorder %s25, %s41
    %p43 = scmp.eq.s32.totalorder %s17, 0
    %p44 = por %p42, %p43
    %s46 = sadd.s32 %s45, 1
    %p49 = scmp.eq.s32.totalorder %s11, 1
    %p50 = scmp.ne.s32.totalorder %s45, %s47
    %p51 = scmp.eq.s32.totalorder %s11, 0
    %p52 = por %p50, %p51
    %p53 = scmp.ne.s32.totalorder %s45, %s47
    %p54 = scmp.eq.s32.totalorder %s16, 1
    %p55 = por %p53, %p54
    %p56 = scmp.ne.s32.totalorder %s47, %s48
    %p57 = scmp.eq.s32.totalorder %s16, 0
    %p58 = por %p56, %p57
    %p59 = scmp.ne.s32.totalorder %s47, %s48
    %p60 = scmp.eq.s32.totalorder %s17, 1
    %p61 = por %p59, %p60
    %p63 = scmp.ne.s32.totalorder %s48, %s62
    %p64 = scmp.eq.s32.totalorder %s17, 0
    %p65 = por %p63, %p64
    %s67 = sadd.s32 %s66, 1
    %p70 = scmp.eq.s32.totalorder %s11, 1
    %p71 = scmp.ne.s32.totalorder %s66, %s68
    %p72 = scmp.eq.s32.totalorder %s11, 0
    %p73 = por %p71, %p72
    %p74 = scmp.ne.s32.totalorder %s66, %s68
    %p75 = scmp.eq.s32.totalorder %s16, 1
    %p76 = por %p74, %p75
    %p77 = scmp.ne.s32.totalorder %s68, %s69
    %p78 = scmp.eq.s32.totalorder %s16, 0
    %p79 = por %p77, %p78
    %p80 = scmp.ne.s32.totalorder %s68, %s69
    %p81 = scmp.eq.s32.totalorder %s17, 1
    %p82 = por %p80, %p81
    %p84 = scmp.ne.s32.totalorder %s69, %s83
    %p85 = scmp.eq.s32.totalorder %s17, 0
    %p86 = por %p84, %p85
    %s88 = sadd.s32 %s87, 1
    %p91 = scmp.eq.s32.totalorder %s11, 1
    %p92 = scmp.ne.s32.totalorder %s87, %s89
    %p93 = scmp.eq.s32.totalorder %s11, 0
    %p94 = por %p92, %p93
    %p95 = scmp.ne.s32.totalorder %s87, %s89
    %p96 = scmp.eq.s32.totalorder %s16, 1
    %p97 = por %p95, %p96
    %p98 = scmp.ne.s32.totalorder %s89, %s90
    %p99 = scmp.eq.s32.totalorder %s16, 0
    %p100 = por %p98, %p99
    %p101 = scmp.ne.s32.totalorder %s89, %s90
    %p102 = scmp.eq.s32.totalorder %s17, 1
    %p103 = por %p101, %p102
    %p105 = scmp.ne.s32.totalorder %s90, %s104
    %p106 = scmp.eq.s32.totalorder %s17, 0
    %p107 = por %p105, %p106
    %s109 = sadd.s32 %s108, 1
    %p112 = scmp.eq.s32.totalorder %s11, 1
    %p113 = scmp.ne.s32.totalorder %s108, %s110
    %p114 = scmp.eq.s32.totalorder %s11, 0
    %p115 = por %p113, %p114
    %p116 = scmp.ne.s32.totalorder %s108, %s110
    %p117 = scmp.eq.s32.totalorder %s16, 1
    %p118 = por %p116, %p117
    %p119 = scmp.ne.s32.totalorder %s110, %s111
    %p120 = scmp.eq.s32.totalorder %s16, 0
    %p121 = por %p119, %p120
    %p122 = scmp.ne.s32.totalorder %s110, %s111
    %p123 = scmp.eq.s32.totalorder %s17, 1
    %p124 = por %p122, %p123
    %p126 = scmp.ne.s32.totalorder %s111, %s125
    %p127 = scmp.eq.s32.totalorder %s17, 0
    %p128 = por %p126, %p127
    %s129 = ssub.s32 %s11, %s18
    %p130 = scmp.eq.s32.totalorder %s129, 0
    %s132 = sadd.s32 %s131, 1
    %s133 = scalar_select %p130, %s131, %s132
    %p136 = pneg %p130
    %p137 = scmp.eq.s32.totalorder %s11, 1
    %p138 = por %p136, %p137
    %p139 = scmp.ne.s32.totalorder %s131, %s134
    %p140 = scmp.eq.s32.totalorder %s11, 0
    %p141 = por %p139, %p140
    %p142 = scmp.ne.s32.totalorder %s131, %s134
    %p143 = scmp.eq.s32.totalorder %s16, 1
    %p144 = por %p142, %p143
    %p145 = scmp.ne.s32.totalorder %s134, %s135
    %p146 = scmp.eq.s32.totalorder %s16, 0
    %p147 = por %p145, %p146
    %p148 = scmp.ne.s32.totalorder %s134, %s135
    %p149 = scmp.eq.s32.totalorder %s17, 1
    %p150 = por %p148, %p149
    %p152 = scmp.ne.s32.totalorder %s135, %s151
    %p153 = scmp.eq.s32.totalorder %s17, 0
    %p154 = por %p152, %p153
    %p155 = scmp.le.s32.totalorder 1, %s11
    %p156 = scmp.lt.s32.totalorder %s11, 3
    %p157 = pnand %p155, %p156
    %p158 = pneg %p157
    // Predicated region
    $region9: #{tpu_custom_call.1} parent=5 // pred_check
      _
    $region10: #{tpu_custom_call.1} parent=5 // pred_check_branch
      %160 = sbr.rel (%p157) target = $region12
    $region11: #{tpu_custom_call.1} parent=5 // pred_region
      %s161 = ssub.s32 %s11, 1
      // Predicated region
      $region13: #{tpu_custom_call.1} parent=11 // pred_check
        %p162 = pneg %p58
      $region14: #{tpu_custom_call.1} parent=11 // pred_check_branch
        %164 = sbr.rel (%p162) target = $region16
      $region15: #{tpu_custom_call.1} parent=11 // pred_region
        _
      $region16: #{tpu_custom_call.1} parent=11 // pred_fallthru
        _
      // Predicated region
      $region17: #{tpu_custom_call.1} parent=11 // pred_check
        %p165 = pneg %p79
      $region18: #{tpu_custom_call.1} parent=11 // pred_check_branch
        %167 = sbr.rel (%p165) target = $region20
      $region19: #{tpu_custom_call.1} parent=11 // pred_region
        _
      $region20: #{tpu_custom_call.1} parent=11 // pred_fallthru
        _
      // Predicated region
      $region21: #{tpu_custom_call.1} parent=11 // pred_check
        %p168 = pneg %p100
      $region22: #{tpu_custom_call.1} parent=11 // pred_check_branch
        %170 = sbr.rel (%p168) target = $region24
      $region23: #{tpu_custom_call.1} parent=11 // pred_region
        _
      $region24: #{tpu_custom_call.1} parent=11 // pred_fallthru
        _
      // Predicated region
      $region25: #{tpu_custom_call.1} parent=11 // pred_check
        %p171 = pneg %p121
      $region26: #{tpu_custom_call.1} parent=11 // pred_check_branch
        %173 = sbr.rel (%p171) target = $region28
      $region27: #{tpu_custom_call.1} parent=11 // pred_region
        _
      $region28: #{tpu_custom_call.1} parent=11 // pred_fallthru
        _
    $region12: #{tpu_custom_call.1} parent=5 // pred_fallthru
      _
    %p174 = scmp.lt.s32.totalorder %s11, 2
    // Predicated region
    $region29: #{tpu_custom_call.1} parent=5 // pred_check
      %p175 = pneg %p174
    $region30: #{tpu_custom_call.1} parent=5 // pred_check_branch
      %177 = sbr.rel (%p175) target = $region32
    $region31: #{tpu_custom_call.1} parent=5 // pred_region
      // Predicated region
      $region33: #{tpu_custom_call.1} parent=31 // pred_check
        %p178 = pneg %p31
      $region34: #{tpu_custom_call.1} parent=31 // pred_check_branch
        %180 = sbr.rel (%p178) target = $region36
      $region35: #{tpu_custom_call.1} parent=31 // pred_region
        %p181 = scmp.lt.s32.totalorder %s11, 1
        %s182 = scalar_select %p181, %s11, 1
        %s183 = smul.addr %s182, 2
        %s184 = smul.addr %s183, 8
        %s185 = scalar_lea.vmem %s0, %s184
      $region36: #{tpu_custom_call.1} parent=31 // pred_fallthru
        _
    $region32: #{tpu_custom_call.1} parent=5 // pred_fallthru
      _
    %p186 = scmp.le.s32.totalorder 1, %s11
    %p187 = scmp.lt.s32.totalorder %s11, 3
    %p188 = pnand %p186, %p187
    %p189 = pneg %p188
    // Predicated region
    $region37: #{tpu_custom_call.1} parent=5 // pred_check
      _
    $region38: #{tpu_custom_call.1} parent=5 // pred_check_branch
      %191 = sbr.rel (%p188) target = $region40
    $region39: #{tpu_custom_call.1} parent=5 // pred_region
      %s192 = ssub.s32 %s11, 1
      %p193 = scmp.lt.s32.totalorder %s16, 1
      %s194 = scalar_select %p193, %s16, 1
      %s195 = smul.addr %s194, 2
      %s196 = smul.addr %s195, 8
      %s197 = scalar_lea.vmem %s0, %s196
      %p198 = pneg %p37
      %p199 = pneg %p34
      %p200 = pneg %p58
      %p201 = pneg %p55
      %p202 = pneg %p79
      %p203 = pneg %p76
      %p204 = pneg %p100
      %p205 = pneg %p97
      %p206 = pneg %p121
      %p207 = pneg %p118
      %p208 = pneg %p147
      %p209 = pneg %p144
      %p210 = scmp.lt.s32.totalorder %s16, 1
      %s211 = scalar_select %p210, %s16, 1
      %s212 = smul.addr %s211, 2
      %s213 = smul.addr %s212, 8
      %s214 = scalar_lea.vmem %s5, %s213
      %p215 = scmp.lt.s32.totalorder %s16, 1
      %s216 = scalar_select %p215, %s16, 1
      %s217 = smul.addr %s216, 2
      %s218 = smul.addr %s217, 8
      %s219 = scalar_lea.vmem %s0, %s218
      %p220 = scmp.lt.s32.totalorder %s16, 1
      %s221 = scalar_select %p220, %s16, 1
      %s222 = smul.addr %s221, 2
      %s223 = smul.addr %s222, 8
      %s224 = scalar_lea.vmem %s5, %s223
      %v225 = vld [vmem:[%s219] sm:$0xff]
      %v226 = vld [vmem:[%s219 + $0x8] sm:$0x1f]
      %vm227 = vcmask 523264
      %v228 = vsel %vm227, %v225, 0.0
      %229 = vadd.xlane.f32.xlu0 %v228
      %v230 = vpop.xlane.xlu0 %229
      %vm231 = vcmask 520192
      %v232 = vsel %vm231, %v226, 0.0
      %233 = vadd.xlane.f32.xlu0 %v232
      %v234 = vpop.xlane.xlu0 %233
      %v235 = vmul.f32 %v225, %v225
      %v236 = vmul.f32 %v226, %v226
      %v237 = vsel %vm227, %v235, 0.0
      %238 = vadd.xlane.f32.xlu0 %v237
      %v239 = vpop.xlane.xlu0 %238
      %v240 = vsel %vm231, %v236, 0.0
      %241 = vadd.xlane.f32.xlu0 %v240
      %v242 = vpop.xlane.xlu0 %241
      %v243 = vld [vmem:[%s1] sm:$0xff]
      %v244 = vld [vmem:[%s1 + $0x8] sm:$0x1f]
      %vm245 = vcmask 7168
      %v246 = vsel %vm245, %v230, %v239
      %v247 = vsel %vm245, %v234, %v242
      %vm248 = vcmask 105472
      %v250 = vsel %vm248, %v243, 0
      %v253 = vsel %vm248, %v244, 0
      %vm255 = vcmask 1044480
      %v257 = vsel %vm255, %v247, 0
      %259 = vmatpush.msra.mxu0 0.0
      %260 = vmatpush.msra.mxu0 0.0
      %261 = vmatpush.msra.mxu0 0.0
      %262 = vmatpush.msra.mxu0 0.0
      %263 = vmatpush.msra.mxu0 0.0
      %264 = vmatpush.msra.mxu0 0.0
      %265 = vmatpush.msra.mxu0 0.0
      %266 = vmatpush.msra.mxu0 0.0
      %267 = vmatpush.msra.mxu0 0.0
      %268 = vmatpush.msra.mxu0 0.0
      %269 = vmatpush.msra.mxu0 0.0
      %270 = vmatpush.msra.mxu0 0.0
      %271 = vmatpush.msra.mxu0 0.0
      %272 = vmatpush.msra.mxu0 0.0
      %273 = vmatpush.msra.mxu0 %v257
      %274 = vmatpush.msra.mxu0 %v246
      %275 = vmatmul.f32.gmra.mxu0 %v250
      %v276 = vpop.f32.mrf.mxu0
      %v277 = vadd.f32 0.0, %v276
      %278 = vmatmul.f32.gmra.mxu0 %v253
      %v279 = vpop.f32.mrf.mxu0
      %v280 = vadd.f32 0.0, %v279
      %281 = vdwg.mxu0
      %v282 = vld [vmem:[%s2] sm:$0xff]
      %v283 = vld [vmem:[%s2 + $0x8] sm:$0x1f]
      %v284 = vmul.f32 %v277, %v282
      %v285 = vmul.f32 %v280, %v283
      %v286 = vmul.f32 %v284, %v284
      %v287 = vmul.f32 %v285, %v285
      %290 = vrot.lane.b32.xlu0 %v286, 1
      %v291 = vpop.permute.xlu0 %290
      %292 = vrot.lane.b32.xlu0 %v287, 1
      %v293 = vpop.permute.xlu0 %292
      %v296 = vsub.f32 %v277, %v291
      %v297 = vsub.f32 %v280, %v293
      %v298 = vadd.f32 %v296, 1e-05
      %v299 = vadd.f32 %v297, 1e-05
      %v300 = vrsqrt.pop %v298
      %v301 = vmul.f32 %v300, %v298
      %v302 = vmul.f32 %v301, %v300
      %v303 = vmul.f32 0.5, %v302
      %v304 = vsub.f32 1.5, %v303
      %v305 = vmul.f32 %v300, %v304
      %vm306 = vweird.f32 %v298
      %vm307 = vweird.f32 %v300
      %vm308 = vmor %vm306, %vm307
      %v309 = vsel %vm308, %v300, %v305
      %v310 = vrsqrt.pop %v299
      %v311 = vmul.f32 %v310, %v299
      %v312 = vmul.f32 %v311, %v310
      %v313 = vmul.f32 0.5, %v312
      %v314 = vsub.f32 1.5, %v313
      %v315 = vmul.f32 %v310, %v314
      %vm316 = vweird.f32 %v299
      %vm317 = vweird.f32 %v310
      %vm318 = vmor %vm316, %vm317
      %v319 = vsel %vm318, %v310, %v315
      %v320 = vld [vmem:[%s3] sm:$0xff]
      %v321 = vld [vmem:[%s3 + $0x8] sm:$0x1f]
      %324 = vrot.lane.b32.xlu0 %v320, 1
      %v325 = vpop.permute.xlu0 %324
      %326 = vrot.lane.b32.xlu0 %v321, 1
      %v327 = vpop.permute.xlu0 %326
      %v330 = vmul.f32 %v309, %v325
      %v331 = vmul.f32 %v319, %v327
      %v332 = vld [vmem:[%s4] sm:$0xff]
      %v333 = vld [vmem:[%s4 + $0x8] sm:$0x1f]
      %336 = vrot.lane.b32.xlu0 %v330, 127
      %v337 = vpop.permute.xlu0 %336
      %338 = vrot.lane.b32.xlu0 %v331, 127
      %v339 = vpop.permute.xlu0 %338
      %v342 = vmul.f32 %v284, %v337
      %v343 = vmul.f32 %v285, %v339
      %v344 = vsub.f32 %v332, %v342
      %v345 = vsub.f32 %v333, %v343
      %346 = vset.pattern.permute.xlu0 1
      %347 = vperm.xlu0 %346, %v330
      %v348 = vpop.permute.xlu0 %347
      %350 = vset.pattern.permute.xlu0 1
      %351 = vperm.xlu0 %350, %v331
      %v352 = vpop.permute.xlu0 %351
      %v354 = vmul.f32 %v225, %v348
      %v355 = vmul.f32 %v226, %v352
      %357 = vset.pattern.permute.xlu0 0
      %358 = vperm.xlu0 %357, %v344
      %v359 = vpop.permute.xlu0 %358
      %362 = vset.pattern.permute.xlu0 0
      %363 = vperm.xlu0 %362, %v345
      %v364 = vpop.permute.xlu0 %363
      %v366 = vadd.f32 %v354, %v359
      %v367 = vadd.f32 %v355, %v364
      %368 = vst.msk [vmem:[%s224] sm:$0xff] %vm227, %v366
      %369 = vst.msk [vmem:[%s224 + $0x8] sm:$0x1f] %vm231, %v367
      %p370 = scmp.lt.s32.totalorder %s16, 1
      %s371 = scalar_select %p370, %s16, 1
      %s372 = smul.addr %s371, 2
      %s373 = smul.addr %s372, 8
      %s374 = scalar_lea.vmem %s5, %s373
      // Predicated region
      $region41: #{tpu_custom_call.1} parent=39 // pred_check
        %p375 = pneg %p144
      $region42: #{tpu_custom_call.1} parent=39 // pred_check_branch
        %377 = sbr.rel (%p375) target = $region44
      $region43: #{tpu_custom_call.1} parent=39 // pred_region
        _
      $region44: #{tpu_custom_call.1} parent=39 // pred_fallthru
        _
    $region40: #{tpu_custom_call.1} parent=5 // pred_fallthru
      _
    %p378 = scmp.le.s32.totalorder 2, %s11
    // Predicated region
    $region45: #{tpu_custom_call.1} parent=5 // pred_check
      %p379 = pneg %p378
    $region46: #{tpu_custom_call.1} parent=5 // pred_check_branch
      %381 = sbr.rel (%p379) target = $region48
    $region47: #{tpu_custom_call.1} parent=5 // pred_region
      %s382 = ssub.s32 %s11, 2
      // Predicated region
      $region49: #{tpu_custom_call.1} parent=47 // pred_check
        %p383 = pneg %p150
      $region50: #{tpu_custom_call.1} parent=47 // pred_check_branch
        %385 = sbr.rel (%p383) target = $region52
      $region51: #{tpu_custom_call.1} parent=47 // pred_region
        %p386 = scmp.lt.s32.totalorder %s17, 1
        %s387 = scalar_select %p386, %s17, 1
        %s388 = smul.addr %s387, 2
        %s389 = smul.addr %s388, 8
        %s390 = scalar_lea.vmem %s5, %s389
      $region52: #{tpu_custom_call.1} parent=47 // pred_fallthru
        _
    $region48: #{tpu_custom_call.1} parent=5 // pred_fallthru
      _
  $region6: #{tpu_custom_call.1} parent=0 // loop_footer
    %s15 = sadd.s32 1, %s11
  $region7: #{tpu_custom_call.1} parent=0 // loop_footer_branch
    %10 = sbr.rel target = $region3
  $region8: #{tpu_custom_call.1} parent=0 // loop_exit
    _

</llo_original>
